<compile_context>
chip_gen: v5e
topology: v5e:2x2
jax: 0.10.0
libtpu: 0.0.40
codegen_flags: <defaults>
</compile_context>

<pallas_src>
import functools

import jax
import jax.numpy as jnp
from jax import lax
from jax.experimental import pallas as pl
from jax.experimental.pallas import tpu as pltpu


def mlp_kernel(x_ref, w1_ref, b1_ref, w2_ref, b2_ref, w3_ref, b3_ref, o_ref, *, chunk):
    # Tiny folded weights: VMEM-resident (constant index_maps), loaded once per step.
    w1 = w1_ref[...]            # (16, 1)  = 0.5  * W1
    b1 = b1_ref[...]            # (16, 1)  = 0.5  * b1
    w2 = w2_ref[...]            # (16, 16) = 0.25 * W2
    b2 = b2_ref[...]            # (16, 1)  = 0.5*b2 + 0.25*W2.sum(1)
    w3 = w3_ref[...]            # (16, 1)  = 0.5  * W3
    b3 = b3_ref[...]            # (1, 1)   = b3 + 0.5*W3.sum(1)

    n_chunks = x_ref.shape[1] // chunk          # static (bt is a multiple of chunk)

    def body(c, carry):
        off = pl.multiple_of(c * chunk, 128)
        x_row = x_ref[:, pl.ds(off, chunk)]                       # (1, chunk)

        # layer 1 (1 -> 16): K=1 matmul as a VPU broadcast FMA; tanh on the EUP.
        t1 = jnp.tanh(w1 * x_row + b1)                            # (16, chunk)

        # layer 2 (16 -> 16): MXU matmul, batch fills the lane/N dimension.
        t2 = jnp.tanh(
            jnp.dot(w2, t1, preferred_element_type=jnp.float32) + b2
        )                                                         # (16, chunk)

        # layer 3 (16 -> 1): VPU mul + XLU sublane reduce (no lane-sparse matmul).
        out = jnp.sum(w3 * t2, axis=0, keepdims=True) + b3        # (1, chunk)
        o_ref[:, pl.ds(off, chunk)] = out.astype(o_ref.dtype)
        return carry

    lax.fori_loop(0, n_chunks, body, 0, unroll=2)


def _tile_size(n, batch_tile, chunk):
    """Lane-tile size: multiple of `chunk`, <= batch_tile, >=2 grid steps if possible."""
    total_chunks = pl.cdiv(n, chunk)
    chunks_per_tile = max(1, min(total_chunks, batch_tile // chunk))
    if total_chunks >= 2:
        # Guarantee at least 2 grid steps so the "parallel" batch axis actually
        # splits across both v7x TensorCores (and balances the two halves).
        chunks_per_tile = min(chunks_per_tile, pl.cdiv(total_chunks, 2))
    return chunks_per_tile * chunk


@functools.partial(jax.jit, static_argnames=("batch_tile", "chunk"))
def standard_mlp_forward(x, params, *, batch_tile=131072, chunk=512):
    """x: (N, 1) float32 (PyTorch layout). Returns (N, 1) float32."""
    w1, b1, w2, b2, w3, b3 = params          # PyTorch layouts: W (out, in), b (out,)
    N, din = x.shape
    assert din == 1
    H = w1.shape[0]                          # 16

    # ---- fold sigmoid's affine parts into the weights: sigmoid(z)=0.5*tanh(0.5z)+0.5
    #   t1  = tanh(0.5*W1 x + 0.5*b1)
    #   t2  = tanh(0.25*W2 t1 + 0.5*b2 + 0.25*W2.sum(1))
    #   out = 0.5*W3 t2 + b3 + 0.5*W3.sum(1)
    w1f = (0.5 * w1).reshape(H, 1).astype(jnp.float32)
    b1f = (0.5 * b1).reshape(H, 1).astype(jnp.float32)
    w2f = (0.25 * w2).astype(jnp.float32)
    b2f = (0.5 * b2 + 0.25 * jnp.sum(w2, axis=1)).reshape(H, 1).astype(jnp.float32)
    w3f = (0.5 * w3).reshape(H, 1).astype(jnp.float32)
    b3f = (b3 + 0.5 * jnp.sum(w3, axis=1)).reshape(1, 1).astype(jnp.float32)

    # ---- lane-dense layout: put the batch on the lane axis ----------------------
    x_row = x.reshape(1, N).astype(jnp.float32)

    bt = _tile_size(N, batch_tile, chunk)
    grid = (pl.cdiv(N, bt),)   # ragged tail handled by Pallas partial-block masking

    kernel = functools.partial(mlp_kernel, chunk=chunk)

    in_specs = [
        pl.BlockSpec((1, bt), lambda i: (0, i)),   # x row, lane-dense batch tile
        pl.BlockSpec((H, 1), lambda i: (0, 0)),    # w1 (VMEM-resident, no re-DMA)
        pl.BlockSpec((H, 1), lambda i: (0, 0)),    # b1
        pl.BlockSpec((H, H), lambda i: (0, 0)),    # w2
        pl.BlockSpec((H, 1), lambda i: (0, 0)),    # b2
        pl.BlockSpec((H, 1), lambda i: (0, 0)),    # w3
        pl.BlockSpec((1, 1), lambda i: (0, 0)),    # b3
    ]
    out_spec = pl.BlockSpec((1, bt), lambda i: (0, i))   # lane-dense output row

    out_row = pl.pallas_call(
        kernel,
        out_shape=jax.ShapeDtypeStruct((1, N), jnp.float32),
        grid_spec=pltpu.PrefetchScalarGridSpec(
            num_scalar_prefetch=0,
            grid=grid,
            in_specs=in_specs,
            out_specs=out_spec,
        ),
        compiler_params=pltpu.CompilerParams(
            dimension_semantics=("parallel",),   # batch axis sharded across v7x TCs
        ),
    )(x_row, w1f, b1f, w2f, b2f, w3f, b3f)

    return out_row.reshape(N, 1)


def init_params(key):
    """Deterministic init mimicking nn.Linear's U(-1/sqrt(fan_in), 1/sqrt(fan_in))."""
    ks = jax.random.split(key, 6)

    def lin(kw, kb, fan_in, fan_out):
        bound = 1.0 / jnp.sqrt(jnp.float32(fan_in))
        w = jax.random.uniform(kw, (fan_out, fan_in), jnp.float32, -bound, bound)
        b = jax.random.uniform(kb, (fan_out,), jnp.float32, -bound, bound)
        return w, b

    w1, b1 = lin(ks[0], ks[1], 1, 16)
    w2, b2 = lin(ks[2], ks[3], 16, 16)
    w3, b3 = lin(ks[4], ks[5], 16, 1)
    return (w1, b1, w2, b2, w3, b3)


def reference_forward(x, params):
    w1, b1, w2, b2, w3, b3 = params
    h1 = jax.nn.sigmoid(x @ w1.T + b1)
    h2 = jax.nn.sigmoid(h1 @ w2.T + b2)
    return h2 @ w3.T + b3


if __name__ == "__main__":
    key = jax.random.PRNGKey(0)
    k_params, k_x = jax.random.split(key)

    params = init_params(k_params)
    N = 1000  # ragged vs the chunk size: exercises the partial-block tail path
    x = jax.random.normal(k_x, (N, 1), jnp.float32)

    # chunk=256 -> bt=512, 2 grid steps, 2 in-kernel lane chunks per step, ragged tail.
    out = standard_mlp_forward(x, params, chunk=256)
    out = jax.block_until_ready(out)

    ref = reference_forward(x, params)
    assert out.shape == (N, 1)
    err = float(jnp.max(jnp.abs(out - ref)))
    assert jnp.allclose(out, ref, atol=1e-4, rtol=1e-4), err

    print("KERNEL_OK")
</pallas_src>

<mosaic_0001>
module attributes {stable_mosaic.version = 11 : i64} {
  func.func @mlp_kernel(%arg0: i32, %arg1: memref<1x512xf32, #tpu.memory_space<vmem>>, %arg2: memref<16x1xf32, #tpu.memory_space<vmem>>, %arg3: memref<16x1xf32, #tpu.memory_space<vmem>>, %arg4: memref<16x16xf32, #tpu.memory_space<vmem>>, %arg5: memref<16x1xf32, #tpu.memory_space<vmem>>, %arg6: memref<16x1xf32, #tpu.memory_space<vmem>>, %arg7: memref<1x1xf32, #tpu.memory_space<vmem>>, %arg8: memref<1x512xf32, #tpu.memory_space<vmem>>) attributes {dimension_semantics = [#tpu.dimension_semantics<parallel>], iteration_bounds = array<i64: 2>, scalar_prefetch = 0 : i64, scratch_operands = 0 : i64, tpu.core_type = #tpu.core_type<tc>, window_params = [{transform_indices = @transform_0, window_bounds = array<i64: 1, 512>}, {pipeline_mode = #tpu.pipeline_mode<synchronous>, transform_indices = @transform_1, window_bounds = array<i64: 16, 1>}, {pipeline_mode = #tpu.pipeline_mode<synchronous>, transform_indices = @transform_2, window_bounds = array<i64: 16, 1>}, {pipeline_mode = #tpu.pipeline_mode<synchronous>, transform_indices = @transform_3, window_bounds = array<i64: 16, 16>}, {pipeline_mode = #tpu.pipeline_mode<synchronous>, transform_indices = @transform_4, window_bounds = array<i64: 16, 1>}, {pipeline_mode = #tpu.pipeline_mode<synchronous>, transform_indices = @transform_5, window_bounds = array<i64: 16, 1>}, {pipeline_mode = #tpu.pipeline_mode<synchronous>, transform_indices = @transform_6, window_bounds = array<i64: 1, 1>}, {transform_indices = @transform_7, window_bounds = array<i64: 1, 512>}]} {
    %c0 = arith.constant 0 : index
    %c0_0 = arith.constant 0 : index
    %0 = vector.load %arg2[%c0, %c0_0] : memref<16x1xf32, #tpu.memory_space<vmem>>, vector<16x1xf32>
    %c0_1 = arith.constant 0 : index
    %c0_2 = arith.constant 0 : index
    %1 = vector.load %arg3[%c0_1, %c0_2] : memref<16x1xf32, #tpu.memory_space<vmem>>, vector<16x1xf32>
    %c0_3 = arith.constant 0 : index
    %c0_4 = arith.constant 0 : index
    %2 = vector.load %arg4[%c0_3, %c0_4] : memref<16x16xf32, #tpu.memory_space<vmem>>, vector<16x16xf32>
    %c0_5 = arith.constant 0 : index
    %c0_6 = arith.constant 0 : index
    %3 = vector.load %arg5[%c0_5, %c0_6] : memref<16x1xf32, #tpu.memory_space<vmem>>, vector<16x1xf32>
    %c0_7 = arith.constant 0 : index
    %c0_8 = arith.constant 0 : index
    %4 = vector.load %arg6[%c0_7, %c0_8] : memref<16x1xf32, #tpu.memory_space<vmem>>, vector<16x1xf32>
    %c0_9 = arith.constant 0 : index
    %c0_10 = arith.constant 0 : index
    %5 = vector.load %arg7[%c0_9, %c0_10] : memref<1x1xf32, #tpu.memory_space<vmem>>, vector<1x1xf32>
    %c0_i32 = arith.constant 0 : i32
    %c256_i32 = arith.constant 256 : i32
    %6 = arith.muli %c0_i32, %c256_i32 : i32
    %7 = tpu.assume_multiple %6, 128 : i32
    %c0_11 = arith.constant 0 : index
    %8 = arith.index_cast %7 : i32 to index
    %9 = vector.load %arg1[%c0_11, %8] : memref<1x512xf32, #tpu.memory_space<vmem>>, vector<1x256xf32>
    %10 = vector.broadcast %0 : vector<16x1xf32> to vector<16x256xf32>
    %11 = vector.broadcast %9 : vector<1x256xf32> to vector<16x256xf32>
    %12 = arith.mulf %10, %11 : vector<16x256xf32>
    %13 = vector.broadcast %1 : vector<16x1xf32> to vector<16x256xf32>
    %14 = arith.addf %12, %13 : vector<16x256xf32>
    %15 = math.tanh %14 : vector<16x256xf32>
    %cst = arith.constant dense<0.000000e+00> : vector<16x256xf32>
    %16 = tpu.matmul %2, %15, %cst {dimension_numbers = #tpu.dot_dimension_numbers<[1], [0], [0], [1], [0, 0, 1, 1], [], []>} : vector<16x16xf32>, vector<16x256xf32>, vector<16x256xf32> -> vector<16x256xf32>
    %17 = vector.broadcast %3 : vector<16x1xf32> to vector<16x256xf32>
    %18 = arith.addf %16, %17 : vector<16x256xf32>
    %19 = math.tanh %18 : vector<16x256xf32>
    %20 = vector.broadcast %4 : vector<16x1xf32> to vector<16x256xf32>
    %21 = arith.mulf %20, %19 : vector<16x256xf32>
    %cst_12 = arith.constant dense<0.000000e+00> : vector<256xf32>
    %22 = vector.multi_reduction <add>, %21, %cst_12 [0] : vector<16x256xf32> to vector<256xf32>
    %23 = vector.shape_cast %22 : vector<256xf32> to vector<1x256xf32>
    %24 = vector.broadcast %5 : vector<1x1xf32> to vector<1x256xf32>
    %25 = arith.addf %23, %24 : vector<1x256xf32>
    %c0_13 = arith.constant 0 : index
    %26 = arith.index_cast %7 : i32 to index
    %27 = vector.load %arg8[%c0_13, %26] : memref<1x512xf32, #tpu.memory_space<vmem>>, vector<1x256xf32>
    tpu.vector_store %arg8[%c0_13, %26], %25 {strides = array<i32>} : memref<1x512xf32, #tpu.memory_space<vmem>>, vector<1x256xf32>,
    %c1_i32 = arith.constant 1 : i32
    %c256_i32_14 = arith.constant 256 : i32
    %28 = arith.muli %c1_i32, %c256_i32_14 : i32
    %29 = tpu.assume_multiple %28, 128 : i32
    %c0_15 = arith.constant 0 : index
    %30 = arith.index_cast %29 : i32 to index
    %31 = vector.load %arg1[%c0_15, %30] : memref<1x512xf32, #tpu.memory_space<vmem>>, vector<1x256xf32>
    %32 = vector.broadcast %0 : vector<16x1xf32> to vector<16x256xf32>
    %33 = vector.broadcast %31 : vector<1x256xf32> to vector<16x256xf32>
    %34 = arith.mulf %32, %33 : vector<16x256xf32>
    %35 = vector.broadcast %1 : vector<16x1xf32> to vector<16x256xf32>
    %36 = arith.addf %34, %35 : vector<16x256xf32>
    %37 = math.tanh %36 : vector<16x256xf32>
    %cst_16 = arith.constant dense<0.000000e+00> : vector<16x256xf32>
    %38 = tpu.matmul %2, %37, %cst_16 {dimension_numbers = #tpu.dot_dimension_numbers<[1], [0], [0], [1], [0, 0, 1, 1], [], []>} : vector<16x16xf32>, vector<16x256xf32>, vector<16x256xf32> -> vector<16x256xf32>
    %39 = vector.broadcast %3 : vector<16x1xf32> to vector<16x256xf32>
    %40 = arith.addf %38, %39 : vector<16x256xf32>
    %41 = math.tanh %40 : vector<16x256xf32>
    %42 = vector.broadcast %4 : vector<16x1xf32> to vector<16x256xf32>
    %43 = arith.mulf %42, %41 : vector<16x256xf32>
    %cst_17 = arith.constant dense<0.000000e+00> : vector<256xf32>
    %44 = vector.multi_reduction <add>, %43, %cst_17 [0] : vector<16x256xf32> to vector<256xf32>
    %45 = vector.shape_cast %44 : vector<256xf32> to vector<1x256xf32>
    %46 = vector.broadcast %5 : vector<1x1xf32> to vector<1x256xf32>
    %47 = arith.addf %45, %46 : vector<1x256xf32>
    %c0_18 = arith.constant 0 : index
    %48 = arith.index_cast %29 : i32 to index
    %49 = vector.load %arg8[%c0_18, %48] : memref<1x512xf32, #tpu.memory_space<vmem>>, vector<1x256xf32>
    tpu.vector_store %arg8[%c0_18, %48], %47 {strides = array<i32>} : memref<1x512xf32, #tpu.memory_space<vmem>>, vector<1x256xf32>,
    %c2_i32 = arith.constant 2 : i32
    return
  }
  func.func @transform_0(%arg0: i32) -> (i32, i32) {
    %c0_i32 = arith.constant 0 : i32
    %c0_i32_0 = arith.constant 0 : i32
    return %c0_i32, %arg0 : i32, i32
  }
  func.func @transform_1(%arg0: i32) -> (i32, i32) {
    %c0_i32 = arith.constant 0 : i32
    %c0_i32_0 = arith.constant 0 : i32
    %c0_i32_1 = arith.constant 0 : i32
    return %c0_i32, %c0_i32_0 : i32, i32
  }
  func.func @transform_2(%arg0: i32) -> (i32, i32) {
    %c0_i32 = arith.constant 0 : i32
    %c0_i32_0 = arith.constant 0 : i32
    %c0_i32_1 = arith.constant 0 : i32
    return %c0_i32, %c0_i32_0 : i32, i32
  }
  func.func @transform_3(%arg0: i32) -> (i32, i32) {
    %c0_i32 = arith.constant 0 : i32
    %c0_i32_0 = arith.constant 0 : i32
    %c0_i32_1 = arith.constant 0 : i32
    return %c0_i32, %c0_i32_0 : i32, i32
  }
  func.func @transform_4(%arg0: i32) -> (i32, i32) {
    %c0_i32 = arith.constant 0 : i32
    %c0_i32_0 = arith.constant 0 : i32
    %c0_i32_1 = arith.constant 0 : i32
    return %c0_i32, %c0_i32_0 : i32, i32
  }
  func.func @transform_5(%arg0: i32) -> (i32, i32) {
    %c0_i32 = arith.constant 0 : i32
    %c0_i32_0 = arith.constant 0 : i32
    %c0_i32_1 = arith.constant 0 : i32
    return %c0_i32, %c0_i32_0 : i32, i32
  }
  func.func @transform_6(%arg0: i32) -> (i32, i32) {
    %c0_i32 = arith.constant 0 : i32
    %c0_i32_0 = arith.constant 0 : i32
    %c0_i32_1 = arith.constant 0 : i32
    return %c0_i32, %c0_i32_0 : i32, i32
  }
  func.func @transform_7(%arg0: i32) -> (i32, i32) {
    %c0_i32 = arith.constant 0 : i32
    %c0_i32_0 = arith.constant 0 : i32
    return %c0_i32, %arg0 : i32, i32
  }
}

</mosaic_0001>

<llo_original>
// kernel: standard_mlp_forward.1
$region0: #{standard_mlp_forward.1}
  #allocation0 [shape = 'u32[]', space=smem, size = 0x4, offset = 0x4, fixed_abs, tag = 'smem constant byte address 0x4 - core index']
  #allocation1 [shape = 'u32[72,128]{1,0:T(1,128)}', space=vmem, size = 0x9000, scoped, tag = 'internal scratch']
  #allocation2 [shape = 'f32[1,1]{1,0:T(1,128)S(1)}', space=vmem, size = 0x200, scoped, tag = 'scoped memory for standard_mlp_forward.1']
  %s0 = inlined_call_operand.vmem [shape: f32[1,1000], index: 0, kind: input, shape index: {}]
  %s1 = inlined_call_operand.vmem [shape: f32[16,1], index: 1, kind: input, shape index: {}]
  %s2 = inlined_call_operand.vmem [shape: f32[16,1], index: 2, kind: input, shape index: {}]
  %s3 = inlined_call_operand.vmem [shape: f32[16,16], index: 3, kind: input, shape index: {}]
  %s4 = inlined_call_operand.vmem [shape: f32[16,1], index: 4, kind: input, shape index: {}]
  %s5 = inlined_call_operand.vmem [shape: f32[16,1], index: 5, kind: input, shape index: {}]
  %s6 = inlined_call_operand.<no memory space> [shape: f32[1,1], index: 6, kind: input, shape index: {}]
  %s7 = inlined_call_operand.hbm [shape: f32[1,1000], index: 7, kind: output, shape index: {}]
  %s8 = sld [smem:[#allocation0]]
  $region61: #{standard_mlp_forward.1} parent=0
    _
  %s10 = ssub.s32 1, %s8
  %s11 = scalar_select 0, %s10, %s8
  %v12 = vstv %s6
  %13 = vst [vmem:[#allocation2] sm:$0x1] %v12
  $region1: #{standard_mlp_forward.1} parent=0
    #allocation3 [shape = 'u8[4096]{0}', space=vmem, size = 0x1000, scoped, tag = 'output window, operand 0']
    #allocation4 [shape = 's32[2]{0}', space=sflag, size = 0x8, scoped, tag = 'scoped memory for standard_mlp_forward.1']
    %14 = vsyncpa [#allocation4], 0
    %s15 = scalar_lea.sflag [#allocation4], 1
    %16 = vsyncpa %s15, 0
    loop: start=0, step=1, limit=4
    $region2: #{standard_mlp_forward.1} parent=1 // loop_pre_header
      _
    $region3: #{standard_mlp_forward.1} parent=1 // loop_header
      %s18 = sphi 0, %s22
      %p19 = scmp.ge.s32.totalorder %s18, 4
      %s28 = sphi 0, %s30
      %s31 = sphi 0, %s28
      %s32 = sphi 0, %s31
      %s48 = sphi 0, %s32
      %s52 = sphi 0, %s52
      %s54 = sphi 0, %s52
      %s55 = sphi 0, %s54
      %s69 = sphi 0, %s55
      %s73 = sphi 0, %s73
      %s75 = sphi 0, %s73
      %s76 = sphi 0, %s75
      %s90 = sphi 0, %s76
      %s94 = sphi 0, %s94
      %s96 = sphi 0, %s94
      %s97 = sphi 0, %s96
      %s111 = sphi 0, %s97
      %s115 = sphi 0, %s115
      %s117 = sphi 0, %s115
      %s118 = sphi 0, %s117
      %s132 = sphi 0, %s118
      %s136 = sphi 0, %s136
      %s138 = sphi 0, %s136
      %s139 = sphi 0, %s138
      %s153 = sphi 0, %s139
      %s157 = sphi 0, %s157
      %s159 = sphi 0, %s157
      %s160 = sphi 0, %s159
      %s174 = sphi 0, %s160
      %s180 = sphi 0, %s182
      %s183 = sphi 0, %s180
      %s184 = sphi 0, %s183
      %s200 = sphi 0, %s184
    $region4: #{standard_mlp_forward.1} parent=1 // loop_header_branch
      %21 = sbr.rel (%p19) target = $region8
    $region5: #{standard_mlp_forward.1} parent=1 // loop_body
      %s23 = ssub.s32 %s18, 1
      %s24 = ssub.s32 %s18, 2
      %s25 = sadd.s32 %s18, 1
      %s26 = ssub.s32 %s18, %s25
      %p27 = scmp.eq.s32.totalorder %s26, 0
      %s29 = sadd.s32 %s28, 1
      %s30 = scalar_select %p27, %s28, %s29
      %p33 = pneg %p27
      %p34 = scmp.eq.s32.totalorder %s18, 1
      %p35 = por %p33, %p34
      %p36 = scmp.ne.s32.totalorder %s28, %s31
      %p37 = scmp.eq.s32.totalorder %s18, 0
      %p38 = por %p36, %p37
      %p39 = scmp.ne.s32.totalorder %s28, %s31
      %p40 = scmp.eq.s32.totalorder %s23, 1
      %p41 = por %p39, %p40
      %p42 = scmp.ne.s32.totalorder %s31, %s32
      %p43 = scmp.eq.s32.totalorder %s23, 0
      %p44 = por %p42, %p43
      %p45 = scmp.ne.s32.totalorder %s31, %s32
      %p46 = scmp.eq.s32.totalorder %s24, 1
      %p47 = por %p45, %p46
      %p49 = scmp.ne.s32.totalorder %s32, %s48
      %p50 = scmp.eq.s32.totalorder %s24, 0
      %p51 = por %p49, %p50
      %s53 = sadd.s32 %s52, 1
      %p56 = scmp.eq.s32.totalorder %s18, 1
      %p57 = scmp.ne.s32.totalorder %s52, %s54
      %p58 = scmp.eq.s32.totalorder %s18, 0
      %p59 = por %p57, %p58
      %p60 = scmp.ne.s32.totalorder %s52, %s54
      %p61 = scmp.eq.s32.totalorder %s23, 1
      %p62 = por %p60, %p61
      %p63 = scmp.ne.s32.totalorder %s54, %s55
      %p64 = scmp.eq.s32.totalorder %s23, 0
      %p65 = por %p63, %p64
      %p66 = scmp.ne.s32.totalorder %s54, %s55
      %p67 = scmp.eq.s32.totalorder %s24, 1
      %p68 = por %p66, %p67
      %p70 = scmp.ne.s32.totalorder %s55, %s69
      %p71 = scmp.eq.s32.totalorder %s24, 0
      %p72 = por %p70, %p71
      %s74 = sadd.s32 %s73, 1
      %p77 = scmp.eq.s32.totalorder %s18, 1
      %p78 = scmp.ne.s32.totalorder %s73, %s75
      %p79 = scmp.eq.s32.totalorder %s18, 0
      %p80 = por %p78, %p79
      %p81 = scmp.ne.s32.totalorder %s73, %s75
      %p82 = scmp.eq.s32.totalorder %s23, 1
      %p83 = por %p81, %p82
      %p84 = scmp.ne.s32.totalorder %s75, %s76
      %p85 = scmp.eq.s32.totalorder %s23, 0
      %p86 = por %p84, %p85
      %p87 = scmp.ne.s32.totalorder %s75, %s76
      %p88 = scmp.eq.s32.totalorder %s24, 1
      %p89 = por %p87, %p88
      %p91 = scmp.ne.s32.totalorder %s76, %s90
      %p92 = scmp.eq.s32.totalorder %s24, 0
      %p93 = por %p91, %p92
      %s95 = sadd.s32 %s94, 1
      %p98 = scmp.eq.s32.totalorder %s18, 1
      %p99 = scmp.ne.s32.totalorder %s94, %s96
      %p100 = scmp.eq.s32.totalorder %s18, 0
      %p101 = por %p99, %p100
      %p102 = scmp.ne.s32.totalorder %s94, %s96
      %p103 = scmp.eq.s32.totalorder %s23, 1
      %p104 = por %p102, %p103
      %p105 = scmp.ne.s32.totalorder %s96, %s97
      %p106 = scmp.eq.s32.totalorder %s23, 0
      %p107 = por %p105, %p106
      %p108 = scmp.ne.s32.totalorder %s96, %s97
      %p109 = scmp.eq.s32.totalorder %s24, 1
      %p110 = por %p108, %p109
      %p112 = scmp.ne.s32.totalorder %s97, %s111
      %p113 = scmp.eq.s32.totalorder %s24, 0
      %p114 = por %p112, %p113
      %s116 = sadd.s32 %s115, 1
      %p119 = scmp.eq.s32.totalorder %s18, 1
      %p120 = scmp.ne.s32.totalorder %s115, %s117
      %p121 = scmp.eq.s32.totalorder %s18, 0
      %p122 = por %p120, %p121
      %p123 = scmp.ne.s32.totalorder %s115, %s117
      %p124 = scmp.eq.s32.totalorder %s23, 1
      %p125 = por %p123, %p124
      %p126 = scmp.ne.s32.totalorder %s117, %s118
      %p127 = scmp.eq.s32.totalorder %s23, 0
      %p128 = por %p126, %p127
      %p129 = scmp.ne.s32.totalorder %s117, %s118
      %p130 = scmp.eq.s32.totalorder %s24, 1
      %p131 = por %p129, %p130
      %p133 = scmp.ne.s32.totalorder %s118, %s132
      %p134 = scmp.eq.s32.totalorder %s24, 0
      %p135 = por %p133, %p134
      %s137 = sadd.s32 %s136, 1
      %p140 = scmp.eq.s32.totalorder %s18, 1
      %p141 = scmp.ne.s32.totalorder %s136, %s138
      %p142 = scmp.eq.s32.totalorder %s18, 0
      %p143 = por %p141, %p142
      %p144 = scmp.ne.s32.totalorder %s136, %s138
      %p145 = scmp.eq.s32.totalorder %s23, 1
      %p146 = por %p144, %p145
      %p147 = scmp.ne.s32.totalorder %s138, %s139
      %p148 = scmp.eq.s32.totalorder %s23, 0
      %p149 = por %p147, %p148
      %p150 = scmp.ne.s32.totalorder %s138, %s139
      %p151 = scmp.eq.s32.totalorder %s24, 1
      %p152 = por %p150, %p151
      %p154 = scmp.ne.s32.totalorder %s139, %s153
      %p155 = scmp.eq.s32.totalorder %s24, 0
      %p156 = por %p154, %p155
      %s158 = sadd.s32 %s157, 1
      %p161 = scmp.eq.s32.totalorder %s18, 1
      %p162 = scmp.ne.s32.totalorder %s157, %s159
      %p163 = scmp.eq.s32.totalorder %s18, 0
      %p164 = por %p162, %p163
      %p165 = scmp.ne.s32.totalorder %s157, %s159
      %p166 = scmp.eq.s32.totalorder %s23, 1
      %p167 = por %p165, %p166
      %p168 = scmp.ne.s32.totalorder %s159, %s160
      %p169 = scmp.eq.s32.totalorder %s23, 0
      %p170 = por %p168, %p169
      %p171 = scmp.ne.s32.totalorder %s159, %s160
      %p172 = scmp.eq.s32.totalorder %s24, 1
      %p173 = por %p171, %p172
      %p175 = scmp.ne.s32.totalorder %s160, %s174
      %p176 = scmp.eq.s32.totalorder %s24, 0
      %p177 = por %p175, %p176
      %s178 = ssub.s32 %s18, %s25
      %p179 = scmp.eq.s32.totalorder %s178, 0
      %s181 = sadd.s32 %s180, 1
      %s182 = scalar_select %p179, %s180, %s181
      %p185 = pneg %p179
      %p186 = scmp.eq.s32.totalorder %s18, 1
      %p187 = por %p185, %p186
      %p188 = scmp.ne.s32.totalorder %s180, %s183
      %p189 = scmp.eq.s32.totalorder %s18, 0
      %p190 = por %p188, %p189
      %p191 = scmp.ne.s32.totalorder %s180, %s183
      %p192 = scmp.eq.s32.totalorder %s23, 1
      %p193 = por %p191, %p192
      %p194 = scmp.ne.s32.totalorder %s183, %s184
      %p195 = scmp.eq.s32.totalorder %s23, 0
      %p196 = por %p194, %p195
      %p197 = scmp.ne.s32.totalorder %s183, %s184
      %p198 = scmp.eq.s32.totalorder %s24, 1
      %p199 = por %p197, %p198
      %p201 = scmp.ne.s32.totalorder %s184, %s200
      %p202 = scmp.eq.s32.totalorder %s24, 0
      %p203 = por %p201, %p202
      %p204 = scmp.le.s32.totalorder 1, %s18
      %p205 = scmp.lt.s32.totalorder %s18, 3
      %p206 = pnand %p204, %p205
      %p207 = pneg %p206
      // Predicated region
      $region9: #{standard_mlp_forward.1} parent=5 // pred_check
        _
      $region10: #{standard_mlp_forward.1} parent=5 // pred_check_branch
        %209 = sbr.rel (%p206) target = $region12
      $region11: #{standard_mlp_forward.1} parent=5 // pred_region
        %s210 = ssub.s32 %s18, 1
        // Predicated region
        $region13: #{standard_mlp_forward.1} parent=11 // pred_check
          %p211 = pneg %p65
        $region14: #{standard_mlp_forward.1} parent=11 // pred_check_branch
          %213 = sbr.rel (%p211) target = $region16
        $region15: #{standard_mlp_forward.1} parent=11 // pred_region
          _
        $region16: #{standard_mlp_forward.1} parent=11 // pred_fallthru
          _
        // Predicated region
        $region17: #{standard_mlp_forward.1} parent=11 // pred_check
          %p214 = pneg %p86
        $region18: #{standard_mlp_forward.1} parent=11 // pred_check_branch
          %216 = sbr.rel (%p214) target = $region20
        $region19: #{standard_mlp_forward.1} parent=11 // pred_region
          _
        $region20: #{standard_mlp_forward.1} parent=11 // pred_fallthru
          _
        // Predicated region
        $region21: #{standard_mlp_forward.1} parent=11 // pred_check
          %p217 = pneg %p107
        $region22: #{standard_mlp_forward.1} parent=11 // pred_check_branch
          %219 = sbr.rel (%p217) target = $region24
        $region23: #{standard_mlp_forward.1} parent=11 // pred_region
          _
        $region24: #{standard_mlp_forward.1} parent=11 // pred_fallthru
          _
        // Predicated region
        $region25: #{standard_mlp_forward.1} parent=11 // pred_check
          %p220 = pneg %p128
        $region26: #{standard_mlp_forward.1} parent=11 // pred_check_branch
          %222 = sbr.rel (%p220) target = $region28
        $region27: #{standard_mlp_forward.1} parent=11 // pred_region
          _
        $region28: #{standard_mlp_forward.1} parent=11 // pred_fallthru
          _
        // Predicated region
        $region29: #{standard_mlp_forward.1} parent=11 // pred_check
          %p223 = pneg %p149
        $region30: #{standard_mlp_forward.1} parent=11 // pred_check_branch
          %225 = sbr.rel (%p223) target = $region32
        $region31: #{standard_mlp_forward.1} parent=11 // pred_region
          _
        $region32: #{standard_mlp_forward.1} parent=11 // pred_fallthru
          _
        // Predicated region
        $region33: #{standard_mlp_forward.1} parent=11 // pred_check
          %p226 = pneg %p170
        $region34: #{standard_mlp_forward.1} parent=11 // pred_check_branch
          %228 = sbr.rel (%p226) target = $region36
        $region35: #{standard_mlp_forward.1} parent=11 // pred_region
          _
        $region36: #{standard_mlp_forward.1} parent=11 // pred_fallthru
          _
      $region12: #{standard_mlp_forward.1} parent=5 // pred_fallthru
        _
      %p229 = scmp.lt.s32.totalorder %s18, 2
      // Predicated region
      $region37: #{standard_mlp_forward.1} parent=5 // pred_check
        %p230 = pneg %p229
      $region38: #{standard_mlp_forward.1} parent=5 // pred_check_branch
        %232 = sbr.rel (%p230) target = $region40
      $region39: #{standard_mlp_forward.1} parent=5 // pred_region
        // Predicated region
        $region41: #{standard_mlp_forward.1} parent=39 // pred_check
          %p233 = pneg %p38
        $region42: #{standard_mlp_forward.1} parent=39 // pred_check_branch
          %235 = sbr.rel (%p233) target = $region44
        $region43: #{standard_mlp_forward.1} parent=39 // pred_region
          %s236 = smul.u32 4, %s18
          %p237 = scmp.lt.s32.totalorder %s236, 7
          %s238 = scalar_select %p237, %s236, 7
          %s239 = scalar_lea.vmem %s0, %s238
          %s240 = smul.u32 4, %s18
        $region44: #{standard_mlp_forward.1} parent=39 // pred_fallthru
          _
      $region40: #{standard_mlp_forward.1} parent=5 // pred_fallthru
        _
      %p241 = scmp.le.s32.totalorder 1, %s18
      %p242 = scmp.lt.s32.totalorder %s18, 3
      %p243 = pnand %p241, %p242
      %p244 = pneg %p243
      // Predicated region
      $region45: #{standard_mlp_forward.1} parent=5 // pred_check
        _
      $region46: #{standard_mlp_forward.1} parent=5 // pred_check_branch
        %246 = sbr.rel (%p243) target = $region48
      $region47: #{standard_mlp_forward.1} parent=5 // pred_region
        %s247 = ssub.s32 %s18, 1
        %s248 = smul.u32 4, %s23
        %p249 = scmp.lt.s32.totalorder %s248, 7
        %s250 = scalar_select %p249, %s248, 7
        %s251 = scalar_lea.vmem %s0, %s250
        %p252 = pneg %p44
        %p253 = pneg %p41
        %p254 = pneg %p65
        %p255 = pneg %p62
        %p256 = pneg %p86
        %p257 = pneg %p83
        %p258 = pneg %p107
        %p259 = pneg %p104
        %p260 = pneg %p128
        %p261 = pneg %p125
        %p262 = pneg %p149
        %p263 = pneg %p146
        %p264 = pneg %p170
        %p265 = pneg %p167
        %p266 = pneg %p196
        %p267 = pneg %p193
        %s268 = sand.u32 %s183, 1
        %s269 = scalar_lea.sflag [#allocation4], %s268
        %s270 = sand.u32 %s183, 1
        %s271 = smul.addr %s270, 4
        %s272 = scalar_lea.vmem [#allocation3], %s271
        %s273 = smul.u32 4, %s23
        %p274 = scmp.lt.s32.totalorder %s273, 7
        %s275 = scalar_select %p274, %s273, 7
        %s276 = scalar_lea.vmem %s0, %s275
        %s277 = smul.u32 4, %s23
        %s278 = smul.u32 4, %s23
        %v279 = vld [vmem:[%s1] sm:$0xff]
        %v280 = vld [vmem:[%s1 + $0x8] sm:$0xff]
        %v281 = vld [vmem:[%s2] sm:$0xff]
        %v282 = vld [vmem:[%s2 + $0x8] sm:$0xff]
        %v283 = vld [vmem:[%s3] sm:$0xff]
        %v284 = vld [vmem:[%s3 + $0x8] sm:$0xff]
        %v285 = vld [vmem:[%s4] sm:$0xff]
        %v286 = vld [vmem:[%s4 + $0x8] sm:$0xff]
        %v287 = vld [vmem:[%s5] sm:$0xff]
        %v288 = vld [vmem:[%s5 + $0x8] sm:$0xff]
        %v289 = vld [vmem:[#allocation2] sm:$0x1]
        %v290 = vld [vmem:[%s276] sm:$0x3]
        %292 = vset.pattern.permute.xlu0 0
        %293 = vperm.xlu0 %292, %v279
        %v294 = vpop.permute.xlu0 %293
        %297 = vset.pattern.permute.xlu0 0
        %298 = vperm.xlu0 %297, %v280
        %v299 = vpop.permute.xlu0 %298
        %v302 = vperm.slane %v290, 0
        %v303 = vperm.slane %v290, 1
        %v306 = vmul.f32 %v294, %v302
        %v307 = vmul.f32 %v294, %v303
        %v308 = vmul.f32 %v299, %v302
        %v309 = vmul.f32 %v299, %v303
        %311 = vset.pattern.permute.xlu0 0
        %312 = vperm.xlu0 %311, %v281
        %v313 = vpop.permute.xlu0 %312
        %316 = vset.pattern.permute.xlu0 0
        %317 = vperm.xlu0 %316, %v282
        %v318 = vpop.permute.xlu0 %317
        %v320 = vadd.f32 %v306, %v313
        %v321 = vadd.f32 %v307, %v313
        %v322 = vadd.f32 %v308, %v318
        %v323 = vadd.f32 %v309, %v318
        %v324 = vtanh.pop %v320
        %v325 = vtanh.pop %v321
        %v326 = vtanh.pop %v322
        %v327 = vtanh.pop %v323
        %329 = vset.pattern.permute.xlu0 0
        %330 = vperm.xlu0 %329, %v285
        %v331 = vpop.permute.xlu0 %330
        %334 = vset.pattern.permute.xlu0 0
        %335 = vperm.xlu0 %334, %v286
        %v336 = vpop.permute.xlu0 %335
        %vm338 = vcmask 130048
        %v340 = vsel %vm338, %v283, 0
        %v343 = vsel %vm338, %v284, 0
        %345 = vmatpush.msra.mxu0 0.0
        %346 = vmatpush.msra.mxu0 0.0
        %347 = vmatpush.msra.mxu0 0.0
        %348 = vmatpush.msra.mxu0 0.0
        %349 = vmatpush.msra.mxu0 0.0
        %350 = vmatpush.msra.mxu0 0.0
        %351 = vmatpush.msra.mxu0 0.0
        %352 = vmatpush.msra.mxu0 0.0
        %353 = vmatpush.msra.mxu0 0.0
        %354 = vmatpush.msra.mxu0 0.0
        %355 = vmatpush.msra.mxu0 0.0
        %356 = vmatpush.msra.mxu0 0.0
        %357 = vmatpush.msra.mxu0 0.0
        %358 = vmatpush.msra.mxu0 0.0
        %359 = vmatpush.msra.mxu0 %v326
        %360 = vmatpush.msra.mxu0 %v324
        %361 = vmatmul.f32.gmra.mxu0 %v340
        %v362 = vpop.f32.mrf.mxu0
        %v363 = vadd.f32 %v331, %v362
        %364 = vmatmul.f32.gmra.mxu0 %v343
        %v365 = vpop.f32.mrf.mxu0
        %v366 = vadd.f32 %v336, %v365
        %367 = vdwg.mxu0
        %368 = vmatpush.msra.mxu0 0.0
        %369 = vmatpush.msra.mxu0 0.0
        %370 = vmatpush.msra.mxu0 0.0
        %371 = vmatpush.msra.mxu0 0.0
        %372 = vmatpush.msra.mxu0 0.0
        %373 = vmatpush.msra.mxu0 0.0
        %374 = vmatpush.msra.mxu0 0.0
        %375 = vmatpush.msra.mxu0 0.0
        %376 = vmatpush.msra.mxu0 0.0
        %377 = vmatpush.msra.mxu0 0.0
        %378 = vmatpush.msra.mxu0 0.0
        %379 = vmatpush.msra.mxu0 0.0
        %380 = vmatpush.msra.mxu0 0.0
        %381 = vmatpush.msra.mxu0 0.0
        %382 = vmatpush.msra.mxu0 %v327
        %383 = vmatpush.msra.mxu0 %v325
        %384 = vmatmul.f32.gmra.mxu0 %v340
        %v385 = vpop.f32.mrf.mxu0
        %v386 = vadd.f32 %v331, %v385
        %387 = vmatmul.f32.gmra.mxu0 %v343
        %v388 = vpop.f32.mrf.mxu0
        %v389 = vadd.f32 %v336, %v388
        %390 = vdwg.mxu0
        %v391 = vtanh.pop %v363
        %v392 = vtanh.pop %v386
        %v393 = vtanh.pop %v366
        %v394 = vtanh.pop %v389
        %396 = vset.pattern.permute.xlu0 0
        %397 = vperm.xlu0 %396, %v287
        %v398 = vpop.permute.xlu0 %397
        %401 = vset.pattern.permute.xlu0 0
        %402 = vperm.xlu0 %401, %v288
        %v403 = vpop.permute.xlu0 %402
        %v405 = vmul.f32 %v398, %v391
        %v406 = vmul.f32 %v398, %v392
        %v407 = vmul.f32 %v403, %v393
        %v408 = vmul.f32 %v403, %v394
        %v409 = vadd.f32 %v405, %v407
        %v410 = vrot.slane %v409, 4
        %v411 = vadd.f32 %v409, %v410
        %v412 = vrot.slane %v411, 2
        %v413 = vadd.f32 %v411, %v412
        %v414 = vrot.slane %v413, 1
        %v415 = vadd.f32 %v413, %v414
        %v416 = vadd.f32 %v406, %v408
        %v417 = vrot.slane %v416, 4
        %v418 = vadd.f32 %v416, %v417
        %v419 = vrot.slane %v418, 2
        %v420 = vadd.f32 %v418, %v419
        %v421 = vrot.slane %v420, 1
        %v422 = vadd.f32 %v420, %v421
        %424 = vset.pattern.permute.xlu0 0
        %425 = vperm.xlu0 %424, %v289
        %v426 = vpop.permute.xlu0 %425
        %v428 = vperm.slane %v426, 0
        %v429 = vadd.f32 %v415, %v428
        %v430 = vadd.f32 %v422, %v428
        %v433 = vrot.slane %v430, 7
        %vm434 = vcmask 1040384
        %v435 = vsel %vm434, %v429, %v433
        %v437 = vlaneseq
        %vm438 = vcmp.ge.s32.totalorder %v437, 0
        %vm439 = vcmp.lt.s32.totalorder %v437, 256
        %vm440 = vmand %vm438, %vm439
        %441 = vst.msk [vmem:[%s272] sm:$0x3] %vm440, %v435
        %s442 = scalar_lea.vmem %s276, 2
        %v443 = vld [vmem:[%s442] sm:$0x3]
        %v445 = vperm.slane %v443, 0
        %v446 = vperm.slane %v443, 1
        %v449 = vmul.f32 %v294, %v445
        %v450 = vmul.f32 %v294, %v446
        %v451 = vmul.f32 %v299, %v445
        %v452 = vmul.f32 %v299, %v446
        %v453 = vadd.f32 %v449, %v313
        %v454 = vadd.f32 %v450, %v313
        %v455 = vadd.f32 %v451, %v318
        %v456 = vadd.f32 %v452, %v318
        %v457 = vtanh.pop %v453
        %v458 = vtanh.pop %v454
        %v459 = vtanh.pop %v455
        %v460 = vtanh.pop %v456
        %461 = vmatpush.msra.mxu0 0.0
        %462 = vmatpush.msra.mxu0 0.0
        %463 = vmatpush.msra.mxu0 0.0
        %464 = vmatpush.msra.mxu0 0.0
        %465 = vmatpush.msra.mxu0 0.0
        %466 = vmatpush.msra.mxu0 0.0
        %467 = vmatpush.msra.mxu0 0.0
        %468 = vmatpush.msra.mxu0 0.0
        %469 = vmatpush.msra.mxu0 0.0
        %470 = vmatpush.msra.mxu0 0.0
        %471 = vmatpush.msra.mxu0 0.0
        %472 = vmatpush.msra.mxu0 0.0
        %473 = vmatpush.msra.mxu0 0.0
        %474 = vmatpush.msra.mxu0 0.0
        %475 = vmatpush.msra.mxu0 %v459
        %476 = vmatpush.msra.mxu0 %v457
        %477 = vmatmul.f32.gmra.mxu0 %v340
        %v478 = vpop.f32.mrf.mxu0
        %v479 = vadd.f32 %v331, %v478
        %480 = vmatmul.f32.gmra.mxu0 %v343
        %v481 = vpop.f32.mrf.mxu0
        %v482 = vadd.f32 %v336, %v481
        %483 = vdwg.mxu0
        %484 = vmatpush.msra.mxu0 0.0
        %485 = vmatpush.msra.mxu0 0.0
        %486 = vmatpush.msra.mxu0 0.0
        %487 = vmatpush.msra.mxu0 0.0
        %488 = vmatpush.msra.mxu0 0.0
        %489 = vmatpush.msra.mxu0 0.0
        %490 = vmatpush.msra.mxu0 0.0
        %491 = vmatpush.msra.mxu0 0.0
        %492 = vmatpush.msra.mxu0 0.0
        %493 = vmatpush.msra.mxu0 0.0
        %494 = vmatpush.msra.mxu0 0.0
        %495 = vmatpush.msra.mxu0 0.0
        %496 = vmatpush.msra.mxu0 0.0
        %497 = vmatpush.msra.mxu0 0.0
        %498 = vmatpush.msra.mxu0 %v460
        %499 = vmatpush.msra.mxu0 %v458
        %500 = vmatmul.f32.gmra.mxu0 %v340
        %v501 = vpop.f32.mrf.mxu0
        %v502 = vadd.f32 %v331, %v501
        %503 = vmatmul.f32.gmra.mxu0 %v343
        %v504 = vpop.f32.mrf.mxu0
        %v505 = vadd.f32 %v336, %v504
        %506 = vdwg.mxu0
        %v507 = vtanh.pop %v479
        %v508 = vtanh.pop %v502
        %v509 = vtanh.pop %v482
        %v510 = vtanh.pop %v505
        %v511 = vmul.f32 %v398, %v507
        %v512 = vmul.f32 %v398, %v508
        %v513 = vmul.f32 %v403, %v509
        %v514 = vmul.f32 %v403, %v510
        %v515 = vadd.f32 %v511, %v513
        %v516 = vrot.slane %v515, 4
        %v517 = vadd.f32 %v515, %v516
        %v518 = vrot.slane %v517, 2
        %v519 = vadd.f32 %v517, %v518
        %v520 = vrot.slane %v519, 1
        %v521 = vadd.f32 %v519, %v520
        %v522 = vadd.f32 %v512, %v514
        %v523 = vrot.slane %v522, 4
        %v524 = vadd.f32 %v522, %v523
        %v525 = vrot.slane %v524, 2
        %v526 = vadd.f32 %v524, %v525
        %v527 = vrot.slane %v526, 1
        %v528 = vadd.f32 %v526, %v527
        %v529 = vadd.f32 %v521, %v428
        %v530 = vadd.f32 %v528, %v428
        %v533 = vrot.slane %v530, 7
        %v534 = vsel %vm434, %v529, %v533
        %s536 = scalar_lea.vmem %s272, 2 [#allocation3]
        %537 = vst.msk [vmem:[%s536] sm:$0x3] %vm440, %v534
        %s538 = sand.u32 %s183, 1
        %s539 = scalar_lea.sflag [#allocation4], %s538
        %s540 = sand.u32 %s183, 1
        %s541 = smul.addr %s540, 4
        %s542 = scalar_lea.vmem [#allocation3], %s541
        // Predicated region
        $region49: #{standard_mlp_forward.1} parent=47 // pred_check
          %p543 = pneg %p193
        $region50: #{standard_mlp_forward.1} parent=47 // pred_check_branch
          %545 = sbr.rel (%p543) target = $region52
        $region51: #{standard_mlp_forward.1} parent=47 // pred_region
          %s546 = smul.u32 4, %s23
          %548 = vsyncadd %s539, 0
          %s549 = scalar_lea.hbm %s7, %s546
          %s551 = sshll.u32 %s542, 4
          %s552 = int_to_ptr.vmem [resolvable:$true] %s551
          %s553 = sshll.u32 %s549, 4
          %s554 = int_to_ptr.hbm [resolvable:$true] %s553
          %556 = dma.vmem_to_hbm [thread:$0]  %s552, 64, %s554, %s539
        $region52: #{standard_mlp_forward.1} parent=47 // pred_fallthru
          _
      $region48: #{standard_mlp_forward.1} parent=5 // pred_fallthru
        _
      %p557 = scmp.le.s32.totalorder 2, %s18
      // Predicated region
      $region53: #{standard_mlp_forward.1} parent=5 // pred_check
        %p558 = pneg %p557
      $region54: #{standard_mlp_forward.1} parent=5 // pred_check_branch
        %560 = sbr.rel (%p558) target = $region56
      $region55: #{standard_mlp_forward.1} parent=5 // pred_region
        %s561 = ssub.s32 %s18, 2
        // Predicated region
        $region57: #{standard_mlp_forward.1} parent=55 // pred_check
          %p562 = pneg %p199
        $region58: #{standard_mlp_forward.1} parent=55 // pred_check_branch
          %564 = sbr.rel (%p562) target = $region60
        $region59: #{standard_mlp_forward.1} parent=55 // pred_region
          %s565 = sand.u32 %s184, 1
          %s566 = scalar_lea.sflag [#allocation4], %s565
          %s567 = sand.u32 %s184, 1
          %s568 = smul.addr %s567, 4
          %s569 = scalar_lea.vmem [#allocation3], %s568
          %571 = dma.done %s566, 64
        $region60: #{standard_mlp_forward.1} parent=55 // pred_fallthru
          _
      $region56: #{standard_mlp_forward.1} parent=5 // pred_fallthru
        _
    $region6: #{standard_mlp_forward.1} parent=1 // loop_footer
      %s22 = sadd.s32 1, %s18
    $region7: #{standard_mlp_forward.1} parent=1 // loop_footer_branch
      %17 = sbr.rel target = $region3
    $region8: #{standard_mlp_forward.1} parent=1 // loop_exit
      _
    %572 = vsyncpa [#allocation4], 1
    %s573 = scalar_lea.sflag [#allocation4], 1
    %574 = vsyncpa %s573, 1

</llo_original>
